<compile_context>
chip_gen: v6e
topology: v6e:2x2x1
jax: 0.10.0
libtpu: 0.0.40
codegen_flags: <defaults>
</compile_context>

<pallas_src>
import functools

import jax
import jax.numpy as jnp
import numpy as np
from jax import lax
from jax.experimental import pallas as pl
from jax.experimental.pallas import tpu as pltpu

H1, H2, H3 = 96, 64, 32
DEFAULT_TB = 1024                         # batch tile on the 128-lane axis; sweep 512/1024/2048
_NT_DIMS = (((1,), (1,)), ((), ()))       # contract last dims: W(out,in) @ x(tb,in)^T


def _mlp_kernel(x_ref, w1_ref, b1_ref, w2_ref, b2_ref, w3_ref, b3_ref,
                w4_ref, b4_ref, out_ref, *, dot_dtype):
    # x arrives in its natural (tb, F) layout; contracting on F ("A @ B^T" form)
    # keeps batch on lanes without materializing a transpose.
    x = x_ref[...].astype(dot_dtype)                                        # (tb, F)
    h = lax.dot_general(w1_ref[...], x, _NT_DIMS,
                        preferred_element_type=jnp.float32) + b1_ref[...]   # (96, tb)
    h = jnp.maximum(h, 0.0)
    h = jnp.dot(w2_ref[...], h.astype(dot_dtype),
                preferred_element_type=jnp.float32) + b2_ref[...]           # (64, tb)
    h = jnp.maximum(h, 0.0)
    h = jnp.dot(w3_ref[...], h.astype(dot_dtype),
                preferred_element_type=jnp.float32) + b3_ref[...]           # (32, tb)
    h = jnp.maximum(h, 0.0)
    out = jnp.dot(w4_ref[...], h.astype(dot_dtype),
                  preferred_element_type=jnp.float32) + b4_ref[...]         # (E, tb)
    out_ref[...] = out.astype(out_ref.dtype)                                # lane-dense store


@functools.partial(jax.jit, static_argnames=("tb", "dot_dtype"))
def mlp_forward(x, params, *, tb=DEFAULT_TB, dot_dtype=jnp.float32):
    """x: (B, F) float32 -> (B, E) float32, same semantics as the PyTorch forward."""
    B, F = x.shape
    E = params["w4"].shape[0]

    # Single tile for small batches (block dims equal to the full array dims satisfy
    # the (8,128) constraint); otherwise a 1-D grid over lane-dense batch tiles with
    # a Pallas-masked ragged last tile.
    if B <= tb:
        tb, n_tiles = B, 1
    else:
        n_tiles = pl.cdiv(B, tb)

    w1 = params["w1"].astype(dot_dtype)
    w2 = params["w2"].astype(dot_dtype)
    w3 = params["w3"].astype(dot_dtype)
    w4 = params["w4"].astype(dot_dtype)
    b1 = params["b1"].reshape(H1, 1).astype(jnp.float32)
    b2 = params["b2"].reshape(H2, 1).astype(jnp.float32)
    b3 = params["b3"].reshape(H3, 1).astype(jnp.float32)
    b4 = params["b4"].reshape(E, 1).astype(jnp.float32)

    def resident(arr):
        # Full-extent block + constant block index -> fetched once, resident in VMEM.
        return pl.BlockSpec(arr.shape, lambda i: (0, 0))

    wbytes = w1.dtype.itemsize
    flops = 2 * B * (H1 * F + H2 * H1 + H3 * H2 + E * H3)
    bytes_accessed = (x.dtype.itemsize * B * F + 4 * B * E
                      + wbytes * (H1 * F + H2 * H1 + H3 * H2 + E * H3)
                      + 4 * (H1 + H2 + H3 + E))

    out_t = pl.pallas_call(
        functools.partial(_mlp_kernel, dot_dtype=dot_dtype),
        out_shape=jax.ShapeDtypeStruct((E, B), jnp.float32),
        grid=(n_tiles,),
        in_specs=[
            pl.BlockSpec((tb, F), lambda i: (i, 0)),        # x tile, auto double-buffered
            resident(w1), resident(b1),
            resident(w2), resident(b2),
            resident(w3), resident(b3),
            resident(w4), resident(b4),
        ],
        out_specs=pl.BlockSpec((E, tb), lambda i: (0, i)),  # lane-dense output tile
        compiler_params=pltpu.CompilerParams(
            dimension_semantics=("parallel",)),             # shard batch tiles across v7x TCs
        cost_estimate=pl.CostEstimate(
            flops=flops, transcendentals=0, bytes_accessed=bytes_accessed),
    )(x, w1, b1, w2, b2, w3, b3, w4, b4)

    # (E, B) -> (B, E): tiny (E*B*4-byte) XLA pass; keeps the kernel's stores lane-dense.
    return out_t.T


# ------------------------- pure-JAX reference (self-check) -------------------------
def reference_forward(x, p):
    h = jax.nn.relu(x @ p["w1"].T + p["b1"])
    h = jax.nn.relu(h @ p["w2"].T + p["b2"])
    h = jax.nn.relu(h @ p["w3"].T + p["b3"])
    return h @ p["w4"].T + p["b4"]


# ----------------------------------------- main -------------------------------------
if __name__ == "__main__":
    B, F, E = 8, 16, 8   # batch, input_features, embedding_size

    key = jax.random.PRNGKey(0)
    ks = jax.random.split(key, 9)

    def init(k, shape, fan_in):
        bound = 1.0 / np.sqrt(fan_in)   # PyTorch nn.Linear default init range
        return jax.random.uniform(k, shape, jnp.float32, -bound, bound)

    params = {
        "w1": init(ks[0], (H1, F), F),   "b1": init(ks[1], (H1,), F),
        "w2": init(ks[2], (H2, H1), H1), "b2": init(ks[3], (H2,), H1),
        "w3": init(ks[4], (H3, H2), H2), "b3": init(ks[5], (H3,), H2),
        "w4": init(ks[6], (E, H3), H3),  "b4": init(ks[7], (E,), H3),
    }
    x = jax.random.normal(ks[8], (B, F), jnp.float32)

    # f32 path: bit-for-bit comparable with the PyTorch/JAX f32 reference.
    out = jax.block_until_ready(mlp_forward(x, params))
    out_ref = reference_forward(x, params)
    np.testing.assert_allclose(np.asarray(out), np.asarray(out_ref), rtol=1e-5, atol=1e-5)
    assert out.shape == (B, E)

    # bf16 dot-input fast path (v6e/v7x): f32 accumulation, looser tolerance.
    out_bf16 = jax.block_until_ready(mlp_forward(x, params, dot_dtype=jnp.bfloat16))
    np.testing.assert_allclose(np.asarray(out_bf16), np.asarray(out_ref), rtol=1e-1, atol=1e-1)

    print("KERNEL_OK")
</pallas_src>

<mosaic_0001>
module attributes {stable_mosaic.version = 11 : i64} {
  func.func @_mlp_kernel(%arg0: i32, %arg1: memref<8x16xf32, #tpu.memory_space<vmem>>, %arg2: memref<96x16xf32, #tpu.memory_space<vmem>>, %arg3: memref<96x1xf32, #tpu.memory_space<vmem>>, %arg4: memref<64x96xf32, #tpu.memory_space<vmem>>, %arg5: memref<64x1xf32, #tpu.memory_space<vmem>>, %arg6: memref<32x64xf32, #tpu.memory_space<vmem>>, %arg7: memref<32x1xf32, #tpu.memory_space<vmem>>, %arg8: memref<8x32xf32, #tpu.memory_space<vmem>>, %arg9: memref<8x1xf32, #tpu.memory_space<vmem>>, %arg10: memref<8x8xf32, #tpu.memory_space<vmem>>) attributes {dimension_semantics = [#tpu.dimension_semantics<parallel>], iteration_bounds = array<i64: 1>, scalar_prefetch = 0 : i64, scratch_operands = 0 : i64, tpu.core_type = #tpu.core_type<tc>, window_params = [{transform_indices = @transform_0, window_bounds = array<i64: 8, 16>}, {pipeline_mode = #tpu.pipeline_mode<synchronous>, transform_indices = @transform_1, window_bounds = array<i64: 96, 16>}, {pipeline_mode = #tpu.pipeline_mode<synchronous>, transform_indices = @transform_2, window_bounds = array<i64: 96, 1>}, {pipeline_mode = #tpu.pipeline_mode<synchronous>, transform_indices = @transform_3, window_bounds = array<i64: 64, 96>}, {pipeline_mode = #tpu.pipeline_mode<synchronous>, transform_indices = @transform_4, window_bounds = array<i64: 64, 1>}, {pipeline_mode = #tpu.pipeline_mode<synchronous>, transform_indices = @transform_5, window_bounds = array<i64: 32, 64>}, {pipeline_mode = #tpu.pipeline_mode<synchronous>, transform_indices = @transform_6, window_bounds = array<i64: 32, 1>}, {pipeline_mode = #tpu.pipeline_mode<synchronous>, transform_indices = @transform_7, window_bounds = array<i64: 8, 32>}, {pipeline_mode = #tpu.pipeline_mode<synchronous>, transform_indices = @transform_8, window_bounds = array<i64: 8, 1>}, {transform_indices = @transform_9, window_bounds = array<i64: 8, 8>}]} {
    %c0 = arith.constant 0 : index
    %c0_0 = arith.constant 0 : index
    %0 = vector.load %arg1[%c0, %c0_0] : memref<8x16xf32, #tpu.memory_space<vmem>>, vector<8x16xf32>
    %c0_1 = arith.constant 0 : index
    %c0_2 = arith.constant 0 : index
    %1 = vector.load %arg2[%c0_1, %c0_2] : memref<96x16xf32, #tpu.memory_space<vmem>>, vector<96x16xf32>
    %cst = arith.constant dense<0.000000e+00> : vector<96x8xf32>
    %2 = tpu.matmul %1, %0, %cst {dimension_numbers = #tpu.dot_dimension_numbers<[1], [1], [0], [0], [0, 0, 1, 0], [], []>} : vector<96x16xf32>, vector<8x16xf32>, vector<96x8xf32> -> vector<96x8xf32>
    %c0_3 = arith.constant 0 : index
    %c0_4 = arith.constant 0 : index
    %3 = vector.load %arg3[%c0_3, %c0_4] : memref<96x1xf32, #tpu.memory_space<vmem>>, vector<96x1xf32>
    %4 = vector.broadcast %3 : vector<96x1xf32> to vector<96x8xf32>
    %5 = arith.addf %2, %4 : vector<96x8xf32>
    %cst_5 = arith.constant 0.000000e+00 : f32
    %6 = vector.broadcast %cst_5 : f32 to vector<96x8xf32>
    %7 = arith.maximumf %5, %6 : vector<96x8xf32>
    %c0_6 = arith.constant 0 : index
    %c0_7 = arith.constant 0 : index
    %8 = vector.load %arg4[%c0_6, %c0_7] : memref<64x96xf32, #tpu.memory_space<vmem>>, vector<64x96xf32>
    %cst_8 = arith.constant dense<0.000000e+00> : vector<64x8xf32>
    %9 = tpu.matmul %8, %7, %cst_8 {dimension_numbers = #tpu.dot_dimension_numbers<[1], [0], [0], [1], [0, 0, 1, 1], [], []>} : vector<64x96xf32>, vector<96x8xf32>, vector<64x8xf32> -> vector<64x8xf32>
    %c0_9 = arith.constant 0 : index
    %c0_10 = arith.constant 0 : index
    %10 = vector.load %arg5[%c0_9, %c0_10] : memref<64x1xf32, #tpu.memory_space<vmem>>, vector<64x1xf32>
    %11 = vector.broadcast %10 : vector<64x1xf32> to vector<64x8xf32>
    %12 = arith.addf %9, %11 : vector<64x8xf32>
    %cst_11 = arith.constant 0.000000e+00 : f32
    %13 = vector.broadcast %cst_11 : f32 to vector<64x8xf32>
    %14 = arith.maximumf %12, %13 : vector<64x8xf32>
    %c0_12 = arith.constant 0 : index
    %c0_13 = arith.constant 0 : index
    %15 = vector.load %arg6[%c0_12, %c0_13] : memref<32x64xf32, #tpu.memory_space<vmem>>, vector<32x64xf32>
    %cst_14 = arith.constant dense<0.000000e+00> : vector<32x8xf32>
    %16 = tpu.matmul %15, %14, %cst_14 {dimension_numbers = #tpu.dot_dimension_numbers<[1], [0], [0], [1], [0, 0, 1, 1], [], []>} : vector<32x64xf32>, vector<64x8xf32>, vector<32x8xf32> -> vector<32x8xf32>
    %c0_15 = arith.constant 0 : index
    %c0_16 = arith.constant 0 : index
    %17 = vector.load %arg7[%c0_15, %c0_16] : memref<32x1xf32, #tpu.memory_space<vmem>>, vector<32x1xf32>
    %18 = vector.broadcast %17 : vector<32x1xf32> to vector<32x8xf32>
    %19 = arith.addf %16, %18 : vector<32x8xf32>
    %cst_17 = arith.constant 0.000000e+00 : f32
    %20 = vector.broadcast %cst_17 : f32 to vector<32x8xf32>
    %21 = arith.maximumf %19, %20 : vector<32x8xf32>
    %c0_18 = arith.constant 0 : index
    %c0_19 = arith.constant 0 : index
    %22 = vector.load %arg8[%c0_18, %c0_19] : memref<8x32xf32, #tpu.memory_space<vmem>>, vector<8x32xf32>
    %cst_20 = arith.constant dense<0.000000e+00> : vector<8x8xf32>
    %23 = tpu.matmul %22, %21, %cst_20 {dimension_numbers = #tpu.dot_dimension_numbers<[1], [0], [0], [1], [0, 0, 1, 1], [], []>} : vector<8x32xf32>, vector<32x8xf32>, vector<8x8xf32> -> vector<8x8xf32>
    %c0_21 = arith.constant 0 : index
    %c0_22 = arith.constant 0 : index
    %24 = vector.load %arg9[%c0_21, %c0_22] : memref<8x1xf32, #tpu.memory_space<vmem>>, vector<8x1xf32>
    %25 = vector.broadcast %24 : vector<8x1xf32> to vector<8x8xf32>
    %26 = arith.addf %23, %25 : vector<8x8xf32>
    %c0_23 = arith.constant 0 : index
    %c0_24 = arith.constant 0 : index
    %27 = vector.load %arg10[%c0_23, %c0_24] : memref<8x8xf32, #tpu.memory_space<vmem>>, vector<8x8xf32>
    tpu.vector_store %arg10[%c0_23, %c0_24], %26 {strides = array<i32>} : memref<8x8xf32, #tpu.memory_space<vmem>>, vector<8x8xf32>,
    return
  }
  func.func @transform_0(%arg0: i32) -> (i32, i32) {
    %c0_i32 = arith.constant 0 : i32
    %c0_i32_0 = arith.constant 0 : i32
    return %arg0, %c0_i32 : i32, i32
  }
  func.func @transform_1(%arg0: i32) -> (i32, i32) {
    %c0_i32 = arith.constant 0 : i32
    %c0_i32_0 = arith.constant 0 : i32
    %c0_i32_1 = arith.constant 0 : i32
    return %c0_i32, %c0_i32_0 : i32, i32
  }
  func.func @transform_2(%arg0: i32) -> (i32, i32) {
    %c0_i32 = arith.constant 0 : i32
    %c0_i32_0 = arith.constant 0 : i32
    %c0_i32_1 = arith.constant 0 : i32
    return %c0_i32, %c0_i32_0 : i32, i32
  }
  func.func @transform_3(%arg0: i32) -> (i32, i32) {
    %c0_i32 = arith.constant 0 : i32
    %c0_i32_0 = arith.constant 0 : i32
    %c0_i32_1 = arith.constant 0 : i32
    return %c0_i32, %c0_i32_0 : i32, i32
  }
  func.func @transform_4(%arg0: i32) -> (i32, i32) {
    %c0_i32 = arith.constant 0 : i32
    %c0_i32_0 = arith.constant 0 : i32
    %c0_i32_1 = arith.constant 0 : i32
    return %c0_i32, %c0_i32_0 : i32, i32
  }
  func.func @transform_5(%arg0: i32) -> (i32, i32) {
    %c0_i32 = arith.constant 0 : i32
    %c0_i32_0 = arith.constant 0 : i32
    %c0_i32_1 = arith.constant 0 : i32
    return %c0_i32, %c0_i32_0 : i32, i32
  }
  func.func @transform_6(%arg0: i32) -> (i32, i32) {
    %c0_i32 = arith.constant 0 : i32
    %c0_i32_0 = arith.constant 0 : i32
    %c0_i32_1 = arith.constant 0 : i32
    return %c0_i32, %c0_i32_0 : i32, i32
  }
  func.func @transform_7(%arg0: i32) -> (i32, i32) {
    %c0_i32 = arith.constant 0 : i32
    %c0_i32_0 = arith.constant 0 : i32
    %c0_i32_1 = arith.constant 0 : i32
    return %c0_i32, %c0_i32_0 : i32, i32
  }
  func.func @transform_8(%arg0: i32) -> (i32, i32) {
    %c0_i32 = arith.constant 0 : i32
    %c0_i32_0 = arith.constant 0 : i32
    %c0_i32_1 = arith.constant 0 : i32
    return %c0_i32, %c0_i32_0 : i32, i32
  }
  func.func @transform_9(%arg0: i32) -> (i32, i32) {
    %c0_i32 = arith.constant 0 : i32
    %c0_i32_0 = arith.constant 0 : i32
    return %c0_i32, %arg0 : i32, i32
  }
}

</mosaic_0001>

<llo_original>
// kernel: mlp_forward.1
$region0: #{mlp_forward.1}
  #allocation0 [shape = 'u32[]', space=smem, size = 0x4, offset = 0x4, fixed_abs, tag = 'smem constant byte address 0x4 - core index']
  #allocation1 [shape = 'u32[144,128]{1,0:T(1,128)}', space=vmem, size = 0x12000, scoped, tag = 'internal scratch']
  %s0 = inlined_call_operand.vmem [shape: f32[8,16], index: 0, kind: input, shape index: {}]
  %s1 = inlined_call_operand.vmem [shape: f32[96,16], index: 1, kind: input, shape index: {}]
  %s2 = inlined_call_operand.vmem [shape: f32[96,1], index: 2, kind: input, shape index: {}]
  %s3 = inlined_call_operand.vmem [shape: f32[64,96], index: 3, kind: input, shape index: {}]
  %s4 = inlined_call_operand.vmem [shape: f32[64,1], index: 4, kind: input, shape index: {}]
  %s5 = inlined_call_operand.vmem [shape: f32[32,64], index: 5, kind: input, shape index: {}]
  %s6 = inlined_call_operand.vmem [shape: f32[32,1], index: 6, kind: input, shape index: {}]
  %s7 = inlined_call_operand.vmem [shape: f32[8,32], index: 7, kind: input, shape index: {}]
  %s8 = inlined_call_operand.vmem [shape: f32[8,1], index: 8, kind: input, shape index: {}]
  %s9 = inlined_call_operand.vmem [shape: f32[8,8], index: 9, kind: output, shape index: {}]
  %s10 = sld [smem:[#allocation0]]
  $region46: #{mlp_forward.1} parent=0
    _
  %s12 = ssub.s32 1, %s10
  %s13 = scalar_select 0, %s12, %s10
  // Predicated region
  $region2: #{mlp_forward.1} parent=0 // pred_check
    _
  $region3: #{mlp_forward.1} parent=0 // pred_check_branch
    %15 = sbr.rel (0) target = $region5
  $region4: #{mlp_forward.1} parent=0 // pred_region
    _
  $region5: #{mlp_forward.1} parent=0 // pred_fallthru
    _
  // Predicated region
  $region6: #{mlp_forward.1} parent=0 // pred_check
    _
  $region7: #{mlp_forward.1} parent=0 // pred_check_branch
    %17 = sbr.rel (0) target = $region9
  $region8: #{mlp_forward.1} parent=0 // pred_region
    _
  $region9: #{mlp_forward.1} parent=0 // pred_fallthru
    _
  // Predicated region
  $region10: #{mlp_forward.1} parent=0 // pred_check
    _
  $region11: #{mlp_forward.1} parent=0 // pred_check_branch
    %19 = sbr.rel (0) target = $region13
  $region12: #{mlp_forward.1} parent=0 // pred_region
    _
  $region13: #{mlp_forward.1} parent=0 // pred_fallthru
    _
  // Predicated region
  $region14: #{mlp_forward.1} parent=0 // pred_check
    _
  $region15: #{mlp_forward.1} parent=0 // pred_check_branch
    %21 = sbr.rel (0) target = $region17
  $region16: #{mlp_forward.1} parent=0 // pred_region
    _
  $region17: #{mlp_forward.1} parent=0 // pred_fallthru
    _
  // Predicated region
  $region18: #{mlp_forward.1} parent=0 // pred_check
    _
  $region19: #{mlp_forward.1} parent=0 // pred_check_branch
    %23 = sbr.rel (0) target = $region21
  $region20: #{mlp_forward.1} parent=0 // pred_region
    _
  $region21: #{mlp_forward.1} parent=0 // pred_fallthru
    _
  // Predicated region
  $region22: #{mlp_forward.1} parent=0 // pred_check
    _
  $region23: #{mlp_forward.1} parent=0 // pred_check_branch
    %25 = sbr.rel (0) target = $region25
  $region24: #{mlp_forward.1} parent=0 // pred_region
    _
  $region25: #{mlp_forward.1} parent=0 // pred_fallthru
    _
  // Predicated region
  $region26: #{mlp_forward.1} parent=0 // pred_check
    _
  $region27: #{mlp_forward.1} parent=0 // pred_check_branch
    %27 = sbr.rel (0) target = $region29
  $region28: #{mlp_forward.1} parent=0 // pred_region
    _
  $region29: #{mlp_forward.1} parent=0 // pred_fallthru
    _
  // Predicated region
  $region30: #{mlp_forward.1} parent=0 // pred_check
    _
  $region31: #{mlp_forward.1} parent=0 // pred_check_branch
    %29 = sbr.rel (0) target = $region33
  $region32: #{mlp_forward.1} parent=0 // pred_region
    _
  $region33: #{mlp_forward.1} parent=0 // pred_fallthru
    _
  // Predicated region
  $region34: #{mlp_forward.1} parent=0 // pred_check
    _
  $region35: #{mlp_forward.1} parent=0 // pred_check_branch
    %31 = sbr.rel (0) target = $region37
  $region36: #{mlp_forward.1} parent=0 // pred_region
    _
  $region37: #{mlp_forward.1} parent=0 // pred_fallthru
    _
  %v32 = vld [vmem:[%s0] sm:$0xff]
  %v33 = vld [vmem:[%s1] sm:$0xff]
  %v34 = vld [vmem:[%s1 + $0x8] sm:$0xff]
  %v35 = vld [vmem:[%s1 + $0x10] sm:$0xff]
  %v36 = vld [vmem:[%s1 + $0x18] sm:$0xff]
  %v37 = vld [vmem:[%s1 + $0x20] sm:$0xff]
  %v38 = vld [vmem:[%s1 + $0x28] sm:$0xff]
  %v39 = vld [vmem:[%s1 + $0x30] sm:$0xff]
  %v40 = vld [vmem:[%s1 + $0x38] sm:$0xff]
  %v41 = vld [vmem:[%s1 + $0x40] sm:$0xff]
  %v42 = vld [vmem:[%s1 + $0x48] sm:$0xff]
  %v43 = vld [vmem:[%s1 + $0x50] sm:$0xff]
  %v44 = vld [vmem:[%s1 + $0x58] sm:$0xff]
  %v45 = vld [vmem:[%s2] sm:$0xff]
  %v46 = vld [vmem:[%s2 + $0x8] sm:$0xff]
  %v47 = vld [vmem:[%s2 + $0x10] sm:$0xff]
  %v48 = vld [vmem:[%s2 + $0x18] sm:$0xff]
  %v49 = vld [vmem:[%s2 + $0x20] sm:$0xff]
  %v50 = vld [vmem:[%s2 + $0x28] sm:$0xff]
  %v51 = vld [vmem:[%s2 + $0x30] sm:$0xff]
  %v52 = vld [vmem:[%s2 + $0x38] sm:$0xff]
  %v53 = vld [vmem:[%s2 + $0x40] sm:$0xff]
  %v54 = vld [vmem:[%s2 + $0x48] sm:$0xff]
  %v55 = vld [vmem:[%s2 + $0x50] sm:$0xff]
  %v56 = vld [vmem:[%s2 + $0x58] sm:$0xff]
  %58 = vset.pattern.permute.xlu0 0
  %59 = vperm.xlu0 %58, %v45
  %v60 = vpop.permute.xlu0 %59
  %63 = vset.pattern.permute.xlu0 0
  %64 = vperm.xlu0 %63, %v46
  %v65 = vpop.permute.xlu0 %64
  %68 = vset.pattern.permute.xlu0 0
  %69 = vperm.xlu0 %68, %v47
  %v70 = vpop.permute.xlu0 %69
  %73 = vset.pattern.permute.xlu0 0
  %74 = vperm.xlu0 %73, %v48
  %v75 = vpop.permute.xlu0 %74
  %78 = vset.pattern.permute.xlu0 0
  %79 = vperm.xlu0 %78, %v49
  %v80 = vpop.permute.xlu0 %79
  %83 = vset.pattern.permute.xlu0 0
  %84 = vperm.xlu0 %83, %v50
  %v85 = vpop.permute.xlu0 %84
  %88 = vset.pattern.permute.xlu0 0
  %89 = vperm.xlu0 %88, %v51
  %v90 = vpop.permute.xlu0 %89
  %93 = vset.pattern.permute.xlu0 0
  %94 = vperm.xlu0 %93, %v52
  %v95 = vpop.permute.xlu0 %94
  %98 = vset.pattern.permute.xlu0 0
  %99 = vperm.xlu0 %98, %v53
  %v100 = vpop.permute.xlu0 %99
  %103 = vset.pattern.permute.xlu0 0
  %104 = vperm.xlu0 %103, %v54
  %v105 = vpop.permute.xlu0 %104
  %108 = vset.pattern.permute.xlu0 0
  %109 = vperm.xlu0 %108, %v55
  %v110 = vpop.permute.xlu0 %109
  %113 = vset.pattern.permute.xlu0 0
  %114 = vperm.xlu0 %113, %v56
  %v115 = vpop.permute.xlu0 %114
  %vm117 = vcmask 130048
  %v119 = vsel %vm117, %v33, 0
  %v122 = vsel %vm117, %v34, 0
  %v125 = vsel %vm117, %v35, 0
  %v128 = vsel %vm117, %v36, 0
  %v131 = vsel %vm117, %v37, 0
  %v134 = vsel %vm117, %v38, 0
  %v137 = vsel %vm117, %v39, 0
  %v140 = vsel %vm117, %v40, 0
  %v143 = vsel %vm117, %v41, 0
  %v146 = vsel %vm117, %v42, 0
  %v149 = vsel %vm117, %v43, 0
  %v152 = vsel %vm117, %v44, 0
  %v155 = vsel %vm117, %v32, 0
  %157 = vmatprep.subr.mxu0 0.0
  %158 = vmatpush1.xpose.msra.mxu0 0.0
  %159 = vmatprep.subr.mxu0 0.0
  %160 = vmatpush1.xpose.msra.mxu0 0.0
  %161 = vmatprep.subr.mxu0 0.0
  %162 = vmatpush1.xpose.msra.mxu0 0.0
  %163 = vmatprep.subr.mxu0 0.0
  %164 = vmatpush1.xpose.msra.mxu0 0.0
  %165 = vmatprep.subr.mxu0 0.0
  %166 = vmatpush1.xpose.msra.mxu0 0.0
  %167 = vmatprep.subr.mxu0 0.0
  %168 = vmatpush1.xpose.msra.mxu0 0.0
  %169 = vmatprep.subr.mxu0 0.0
  %170 = vmatpush1.xpose.msra.mxu0 0.0
  %171 = vmatprep.subr.mxu0 0.0
  %172 = vmatpush1.xpose.msra.mxu0 0.0
  %173 = vmatprep.subr.mxu0 0.0
  %174 = vmatpush1.xpose.msra.mxu0 0.0
  %175 = vmatprep.subr.mxu0 0.0
  %176 = vmatpush1.xpose.msra.mxu0 0.0
  %177 = vmatprep.subr.mxu0 0.0
  %178 = vmatpush1.xpose.msra.mxu0 0.0
  %179 = vmatprep.subr.mxu0 0.0
  %180 = vmatpush1.xpose.msra.mxu0 0.0
  %181 = vmatprep.subr.mxu0 0.0
  %182 = vmatpush1.xpose.msra.mxu0 0.0
  %183 = vmatprep.subr.mxu0 0.0
  %184 = vmatpush1.xpose.msra.mxu0 0.0
  %185 = vmatprep.subr.mxu0 0.0
  %186 = vmatpush1.xpose.msra.mxu0 0.0
  %187 = vmatprep.subr.mxu0 0.0
  %188 = vmatpush1.xpose.msra.mxu0 %v155
  %189 = vmatprep.subr.mxu0 0.0
  %190 = vmatpush2.xpose.msra.mxu0 0.0
  %191 = vmatprep.subr.mxu0 0.0
  %192 = vmatpush2.xpose.msra.mxu0 0.0
  %193 = vmatprep.subr.mxu0 0.0
  %194 = vmatpush2.xpose.msra.mxu0 0.0
  %195 = vmatprep.subr.mxu0 0.0
  %196 = vmatpush2.xpose.msra.mxu0 0.0
  %197 = vmatprep.subr.mxu0 0.0
  %198 = vmatpush2.xpose.msra.mxu0 0.0
  %199 = vmatprep.subr.mxu0 0.0
  %200 = vmatpush2.xpose.msra.mxu0 0.0
  %201 = vmatprep.subr.mxu0 0.0
  %202 = vmatpush2.xpose.msra.mxu0 0.0
  %203 = vmatprep.subr.mxu0 0.0
  %204 = vmatpush2.xpose.msra.mxu0 0.0
  %205 = vmatprep.subr.mxu0 0.0
  %206 = vmatpush2.xpose.msra.mxu0 0.0
  %207 = vmatprep.subr.mxu0 0.0
  %208 = vmatpush2.xpose.msra.mxu0 0.0
  %209 = vmatprep.subr.mxu0 0.0
  %210 = vmatpush2.xpose.msra.mxu0 0.0
  %211 = vmatprep.subr.mxu0 0.0
  %212 = vmatpush2.xpose.msra.mxu0 0.0
  %213 = vmatprep.subr.mxu0 0.0
  %214 = vmatpush2.xpose.msra.mxu0 0.0
  %215 = vmatprep.subr.mxu0 0.0
  %216 = vmatpush2.xpose.msra.mxu0 0.0
  %217 = vmatprep.subr.mxu0 0.0
  %218 = vmatpush2.xpose.msra.mxu0 0.0
  %219 = vmatprep.subr.mxu0 0.0
  %220 = vmatpush2.xpose.msra.mxu0 0.0
  %221 = vmatprep.mubr.f32.mxu0 0.0
  %222 = vmatmul.mubr.f32.gmra.mxu0 %v119
  %v223 = vpop.f32.mrf.mxu0
  %v224 = vadd.f32 %v60, %v223
  %v225 = vpop.f32.mrf.mxu0
  %226 = vmatprep.mubr.f32.mxu0 0.0
  %227 = vmatmul.mubr.f32.gmra.mxu0 %v122
  %v228 = vpop.f32.mrf.mxu0
  %v229 = vadd.f32 %v65, %v228
  %v230 = vpop.f32.mrf.mxu0
  %231 = vmatprep.mubr.f32.mxu0 0.0
  %232 = vmatmul.mubr.f32.gmra.mxu0 %v125
  %v233 = vpop.f32.mrf.mxu0
  %v234 = vadd.f32 %v70, %v233
  %v235 = vpop.f32.mrf.mxu0
  %236 = vmatprep.mubr.f32.mxu0 0.0
  %237 = vmatmul.mubr.f32.gmra.mxu0 %v128
  %v238 = vpop.f32.mrf.mxu0
  %v239 = vadd.f32 %v75, %v238
  %v240 = vpop.f32.mrf.mxu0
  %241 = vmatprep.mubr.f32.mxu0 0.0
  %242 = vmatmul.mubr.f32.gmra.mxu0 %v131
  %v243 = vpop.f32.mrf.mxu0
  %v244 = vadd.f32 %v80, %v243
  %v245 = vpop.f32.mrf.mxu0
  %246 = vmatprep.mubr.f32.mxu0 0.0
  %247 = vmatmul.mubr.f32.gmra.mxu0 %v134
  %v248 = vpop.f32.mrf.mxu0
  %v249 = vadd.f32 %v85, %v248
  %v250 = vpop.f32.mrf.mxu0
  %251 = vmatprep.mubr.f32.mxu0 0.0
  %252 = vmatmul.mubr.f32.gmra.mxu0 %v137
  %v253 = vpop.f32.mrf.mxu0
  %v254 = vadd.f32 %v90, %v253
  %v255 = vpop.f32.mrf.mxu0
  %256 = vmatprep.mubr.f32.mxu0 0.0
  %257 = vmatmul.mubr.f32.gmra.mxu0 %v140
  %v258 = vpop.f32.mrf.mxu0
  %v259 = vadd.f32 %v95, %v258
  %v260 = vpop.f32.mrf.mxu0
  %261 = vmatprep.mubr.f32.mxu0 0.0
  %262 = vmatmul.mubr.f32.gmra.mxu0 %v143
  %v263 = vpop.f32.mrf.mxu0
  %v264 = vadd.f32 %v100, %v263
  %v265 = vpop.f32.mrf.mxu0
  %266 = vmatprep.mubr.f32.mxu0 0.0
  %267 = vmatmul.mubr.f32.gmra.mxu0 %v146
  %v268 = vpop.f32.mrf.mxu0
  %v269 = vadd.f32 %v105, %v268
  %v270 = vpop.f32.mrf.mxu0
  %271 = vmatprep.mubr.f32.mxu0 0.0
  %272 = vmatmul.mubr.f32.gmra.mxu0 %v149
  %v273 = vpop.f32.mrf.mxu0
  %v274 = vadd.f32 %v110, %v273
  %v275 = vpop.f32.mrf.mxu0
  %276 = vmatprep.mubr.f32.mxu0 0.0
  %277 = vmatmul.mubr.f32.gmra.mxu0 %v152
  %v278 = vpop.f32.mrf.mxu0
  %v279 = vadd.f32 %v115, %v278
  %v280 = vpop.f32.mrf.mxu0
  %281 = vdwg.mxu0
  %v282 = vmax.f32 %v224, 0.0
  %v283 = vmax.f32 %v229, 0.0
  %v284 = vmax.f32 %v234, 0.0
  %v285 = vmax.f32 %v239, 0.0
  %v286 = vmax.f32 %v244, 0.0
  %v287 = vmax.f32 %v249, 0.0
  %v288 = vmax.f32 %v254, 0.0
  %v289 = vmax.f32 %v259, 0.0
  %v290 = vmax.f32 %v264, 0.0
  %v291 = vmax.f32 %v269, 0.0
  %v292 = vmax.f32 %v274, 0.0
  %v293 = vmax.f32 %v279, 0.0
  %v294 = vld [vmem:[%s3] sm:$0xff]
  %v295 = vld [vmem:[%s3 + $0x8] sm:$0xff]
  %v296 = vld [vmem:[%s3 + $0x10] sm:$0xff]
  %v297 = vld [vmem:[%s3 + $0x18] sm:$0xff]
  %v298 = vld [vmem:[%s3 + $0x20] sm:$0xff]
  %v299 = vld [vmem:[%s3 + $0x28] sm:$0xff]
  %v300 = vld [vmem:[%s3 + $0x30] sm:$0xff]
  %v301 = vld [vmem:[%s3 + $0x38] sm:$0xff]
  %v302 = vld [vmem:[%s4] sm:$0xff]
  %v303 = vld [vmem:[%s4 + $0x8] sm:$0xff]
  %v304 = vld [vmem:[%s4 + $0x10] sm:$0xff]
  %v305 = vld [vmem:[%s4 + $0x18] sm:$0xff]
  %v306 = vld [vmem:[%s4 + $0x20] sm:$0xff]
  %v307 = vld [vmem:[%s4 + $0x28] sm:$0xff]
  %v308 = vld [vmem:[%s4 + $0x30] sm:$0xff]
  %v309 = vld [vmem:[%s4 + $0x38] sm:$0xff]
  %311 = vset.pattern.permute.xlu0 0
  %312 = vperm.xlu0 %311, %v302
  %v313 = vpop.permute.xlu0 %312
  %316 = vset.pattern.permute.xlu0 0
  %317 = vperm.xlu0 %316, %v303
  %v318 = vpop.permute.xlu0 %317
  %321 = vset.pattern.permute.xlu0 0
  %322 = vperm.xlu0 %321, %v304
  %v323 = vpop.permute.xlu0 %322
  %326 = vset.pattern.permute.xlu0 0
  %327 = vperm.xlu0 %326, %v305
  %v328 = vpop.permute.xlu0 %327
  %331 = vset.pattern.permute.xlu0 0
  %332 = vperm.xlu0 %331, %v306
  %v333 = vpop.permute.xlu0 %332
  %336 = vset.pattern.permute.xlu0 0
  %337 = vperm.xlu0 %336, %v307
  %v338 = vpop.permute.xlu0 %337
  %341 = vset.pattern.permute.xlu0 0
  %342 = vperm.xlu0 %341, %v308
  %v343 = vpop.permute.xlu0 %342
  %346 = vset.pattern.permute.xlu0 0
  %347 = vperm.xlu0 %346, %v309
  %v348 = vpop.permute.xlu0 %347
  %vm350 = vcmask 785408
  %v352 = vsel %vm350, %v294, 0
  %v355 = vsel %vm350, %v295, 0
  %v358 = vsel %vm350, %v296, 0
  %v361 = vsel %vm350, %v297, 0
  %v364 = vsel %vm350, %v298, 0
  %v367 = vsel %vm350, %v299, 0
  %v370 = vsel %vm350, %v300, 0
  %v373 = vsel %vm350, %v301, 0
  %375 = vmatprep.subr.mxu0 0.0
  %376 = vmatpush1.msra.mxu0 0.0
  %377 = vmatprep.subr.mxu0 0.0
  %378 = vmatpush1.msra.mxu0 0.0
  %379 = vmatprep.subr.mxu0 0.0
  %380 = vmatpush1.msra.mxu0 0.0
  %381 = vmatprep.subr.mxu0 0.0
  %382 = vmatpush1.msra.mxu0 0.0
  %383 = vmatprep.subr.mxu0 0.0
  %384 = vmatpush1.msra.mxu0 %v293
  %385 = vmatprep.subr.mxu0 0.0
  %386 = vmatpush1.msra.mxu0 %v292
  %387 = vmatprep.subr.mxu0 0.0
  %388 = vmatpush1.msra.mxu0 %v291
  %389 = vmatprep.subr.mxu0 0.0
  %390 = vmatpush1.msra.mxu0 %v290
  %391 = vmatprep.subr.mxu0 0.0
  %392 = vmatpush1.msra.mxu0 %v289
  %393 = vmatprep.subr.mxu0 0.0
  %394 = vmatpush1.msra.mxu0 %v288
  %395 = vmatprep.subr.mxu0 0.0
  %396 = vmatpush1.msra.mxu0 %v287
  %397 = vmatprep.subr.mxu0 0.0
  %398 = vmatpush1.msra.mxu0 %v286
  %399 = vmatprep.subr.mxu0 0.0
  %400 = vmatpush1.msra.mxu0 %v285
  %401 = vmatprep.subr.mxu0 0.0
  %402 = vmatpush1.msra.mxu0 %v284
  %403 = vmatprep.subr.mxu0 0.0
  %404 = vmatpush1.msra.mxu0 %v283
  %405 = vmatprep.subr.mxu0 0.0
  %406 = vmatpush1.msra.mxu0 %v282
  %407 = vmatprep.subr.mxu0 0.0
  %408 = vmatpush2.msra.mxu0 0.0
  %409 = vmatprep.subr.mxu0 0.0
  %410 = vmatpush2.msra.mxu0 0.0
  %411 = vmatprep.subr.mxu0 0.0
  %412 = vmatpush2.msra.mxu0 0.0
  %413 = vmatprep.subr.mxu0 0.0
  %414 = vmatpush2.msra.mxu0 0.0
  %415 = vmatprep.subr.mxu0 0.0
  %416 = vmatpush2.msra.mxu0 0.0
  %417 = vmatprep.subr.mxu0 0.0
  %418 = vmatpush2.msra.mxu0 0.0
  %419 = vmatprep.subr.mxu0 0.0
  %420 = vmatpush2.msra.mxu0 0.0
  %421 = vmatprep.subr.mxu0 0.0
  %422 = vmatpush2.msra.mxu0 0.0
  %423 = vmatprep.subr.mxu0 0.0
  %424 = vmatpush2.msra.mxu0 0.0
  %425 = vmatprep.subr.mxu0 0.0
  %426 = vmatpush2.msra.mxu0 0.0
  %427 = vmatprep.subr.mxu0 0.0
  %428 = vmatpush2.msra.mxu0 0.0
  %429 = vmatprep.subr.mxu0 0.0
  %430 = vmatpush2.msra.mxu0 0.0
  %431 = vmatprep.subr.mxu0 0.0
  %432 = vmatpush2.msra.mxu0 0.0
  %433 = vmatprep.subr.mxu0 0.0
  %434 = vmatpush2.msra.mxu0 0.0
  %435 = vmatprep.subr.mxu0 0.0
  %436 = vmatpush2.msra.mxu0 0.0
  %437 = vmatprep.subr.mxu0 0.0
  %438 = vmatpush2.msra.mxu0 0.0
  %439 = vmatprep.mubr.f32.mxu0 0.0
  %440 = vmatmul.mubr.f32.gmra.mxu0 %v352
  %v441 = vpop.f32.mrf.mxu0
  %v442 = vadd.f32 %v313, %v441
  %v443 = vpop.f32.mrf.mxu0
  %444 = vmatprep.mubr.f32.mxu0 0.0
  %445 = vmatmul.mubr.f32.gmra.mxu0 %v355
  %v446 = vpop.f32.mrf.mxu0
  %v447 = vadd.f32 %v318, %v446
  %v448 = vpop.f32.mrf.mxu0
  %449 = vmatprep.mubr.f32.mxu0 0.0
  %450 = vmatmul.mubr.f32.gmra.mxu0 %v358
  %v451 = vpop.f32.mrf.mxu0
  %v452 = vadd.f32 %v323, %v451
  %v453 = vpop.f32.mrf.mxu0
  %454 = vmatprep.mubr.f32.mxu0 0.0
  %455 = vmatmul.mubr.f32.gmra.mxu0 %v361
  %v456 = vpop.f32.mrf.mxu0
  %v457 = vadd.f32 %v328, %v456
  %v458 = vpop.f32.mrf.mxu0
  %459 = vmatprep.mubr.f32.mxu0 0.0
  %460 = vmatmul.mubr.f32.gmra.mxu0 %v364
  %v461 = vpop.f32.mrf.mxu0
  %v462 = vadd.f32 %v333, %v461
  %v463 = vpop.f32.mrf.mxu0
  %464 = vmatprep.mubr.f32.mxu0 0.0
  %465 = vmatmul.mubr.f32.gmra.mxu0 %v367
  %v466 = vpop.f32.mrf.mxu0
  %v467 = vadd.f32 %v338, %v466
  %v468 = vpop.f32.mrf.mxu0
  %469 = vmatprep.mubr.f32.mxu0 0.0
  %470 = vmatmul.mubr.f32.gmra.mxu0 %v370
  %v471 = vpop.f32.mrf.mxu0
  %v472 = vadd.f32 %v343, %v471
  %v473 = vpop.f32.mrf.mxu0
  %474 = vmatprep.mubr.f32.mxu0 0.0
  %475 = vmatmul.mubr.f32.gmra.mxu0 %v373
  %v476 = vpop.f32.mrf.mxu0
  %v477 = vadd.f32 %v348, %v476
  %v478 = vpop.f32.mrf.mxu0
  %479 = vdwg.mxu0
  %v480 = vmax.f32 %v442, 0.0
  %v481 = vmax.f32 %v447, 0.0
  %v482 = vmax.f32 %v452, 0.0
  %v483 = vmax.f32 %v457, 0.0
  %v484 = vmax.f32 %v462, 0.0
  %v485 = vmax.f32 %v467, 0.0
  %v486 = vmax.f32 %v472, 0.0
  %v487 = vmax.f32 %v477, 0.0
  %v488 = vld [vmem:[%s5] sm:$0xff]
  %v489 = vld [vmem:[%s5 + $0x8] sm:$0xff]
  %v490 = vld [vmem:[%s5 + $0x10] sm:$0xff]
  %v491 = vld [vmem:[%s5 + $0x18] sm:$0xff]
  %v492 = vld [vmem:[%s6] sm:$0xff]
  %v493 = vld [vmem:[%s6 + $0x8] sm:$0xff]
  %v494 = vld [vmem:[%s6 + $0x10] sm:$0xff]
  %v495 = vld [vmem:[%s6 + $0x18] sm:$0xff]
  %497 = vset.pattern.permute.xlu0 0
  %498 = vperm.xlu0 %497, %v492
  %v499 = vpop.permute.xlu0 %498
  %502 = vset.pattern.permute.xlu0 0
  %503 = vperm.xlu0 %502, %v493
  %v504 = vpop.permute.xlu0 %503
  %507 = vset.pattern.permute.xlu0 0
  %508 = vperm.xlu0 %507, %v494
  %v509 = vpop.permute.xlu0 %508
  %512 = vset.pattern.permute.xlu0 0
  %513 = vperm.xlu0 %512, %v495
  %v514 = vpop.permute.xlu0 %513
  %vm516 = vcmask 523264
  %v518 = vsel %vm516, %v488, 0
  %v521 = vsel %vm516, %v489, 0
  %v524 = vsel %vm516, %v490, 0
  %v527 = vsel %vm516, %v491, 0
  %529 = vmatprep.subr.mxu0 0.0
  %530 = vmatpush1.msra.mxu0 0.0
  %531 = vmatprep.subr.mxu0 0.0
  %532 = vmatpush1.msra.mxu0 0.0
  %533 = vmatprep.subr.mxu0 0.0
  %534 = vmatpush1.msra.mxu0 0.0
  %535 = vmatprep.subr.mxu0 0.0
  %536 = vmatpush1.msra.mxu0 0.0
  %537 = vmatprep.subr.mxu0 0.0
  %538 = vmatpush1.msra.mxu0 0.0
  %539 = vmatprep.subr.mxu0 0.0
  %540 = vmatpush1.msra.mxu0 0.0
  %541 = vmatprep.subr.mxu0 0.0
  %542 = vmatpush1.msra.mxu0 0.0
  %543 = vmatprep.subr.mxu0 0.0
  %544 = vmatpush1.msra.mxu0 0.0
  %545 = vmatprep.subr.mxu0 0.0
  %546 = vmatpush1.msra.mxu0 %v487
  %547 = vmatprep.subr.mxu0 0.0
  %548 = vmatpush1.msra.mxu0 %v486
  %549 = vmatprep.subr.mxu0 0.0
  %550 = vmatpush1.msra.mxu0 %v485
  %551 = vmatprep.subr.mxu0 0.0
  %552 = vmatpush1.msra.mxu0 %v484
  %553 = vmatprep.subr.mxu0 0.0
  %554 = vmatpush1.msra.mxu0 %v483
  %555 = vmatprep.subr.mxu0 0.0
  %556 = vmatpush1.msra.mxu0 %v482
  %557 = vmatprep.subr.mxu0 0.0
  %558 = vmatpush1.msra.mxu0 %v481
  %559 = vmatprep.subr.mxu0 0.0
  %560 = vmatpush1.msra.mxu0 %v480
  %561 = vmatprep.subr.mxu0 0.0
  %562 = vmatpush2.msra.mxu0 0.0
  %563 = vmatprep.subr.mxu0 0.0
  %564 = vmatpush2.msra.mxu0 0.0
  %565 = vmatprep.subr.mxu0 0.0
  %566 = vmatpush2.msra.mxu0 0.0
  %567 = vmatprep.subr.mxu0 0.0
  %568 = vmatpush2.msra.mxu0 0.0
  %569 = vmatprep.subr.mxu0 0.0
  %570 = vmatpush2.msra.mxu0 0.0
  %571 = vmatprep.subr.mxu0 0.0
  %572 = vmatpush2.msra.mxu0 0.0
  %573 = vmatprep.subr.mxu0 0.0
  %574 = vmatpush2.msra.mxu0 0.0
  %575 = vmatprep.subr.mxu0 0.0
  %576 = vmatpush2.msra.mxu0 0.0
  %577 = vmatprep.subr.mxu0 0.0
  %578 = vmatpush2.msra.mxu0 0.0
  %579 = vmatprep.subr.mxu0 0.0
  %580 = vmatpush2.msra.mxu0 0.0
  %581 = vmatprep.subr.mxu0 0.0
  %582 = vmatpush2.msra.mxu0 0.0
  %583 = vmatprep.subr.mxu0 0.0
  %584 = vmatpush2.msra.mxu0 0.0
  %585 = vmatprep.subr.mxu0 0.0
  %586 = vmatpush2.msra.mxu0 0.0
  %587 = vmatprep.subr.mxu0 0.0
  %588 = vmatpush2.msra.mxu0 0.0
  %589 = vmatprep.subr.mxu0 0.0
  %590 = vmatpush2.msra.mxu0 0.0
  %591 = vmatprep.subr.mxu0 0.0
  %592 = vmatpush2.msra.mxu0 0.0
  %593 = vmatprep.mubr.f32.mxu0 0.0
  %594 = vmatmul.mubr.f32.gmra.mxu0 %v518
  %v595 = vpop.f32.mrf.mxu0
  %v596 = vadd.f32 %v499, %v595
  %v597 = vpop.f32.mrf.mxu0
  %598 = vmatprep.mubr.f32.mxu0 0.0
  %599 = vmatmul.mubr.f32.gmra.mxu0 %v521
  %v600 = vpop.f32.mrf.mxu0
  %v601 = vadd.f32 %v504, %v600
  %v602 = vpop.f32.mrf.mxu0
  %603 = vmatprep.mubr.f32.mxu0 0.0
  %604 = vmatmul.mubr.f32.gmra.mxu0 %v524
  %v605 = vpop.f32.mrf.mxu0
  %v606 = vadd.f32 %v509, %v605
  %v607 = vpop.f32.mrf.mxu0
  %608 = vmatprep.mubr.f32.mxu0 0.0
  %609 = vmatmul.mubr.f32.gmra.mxu0 %v527
  %v610 = vpop.f32.mrf.mxu0
  %v611 = vadd.f32 %v514, %v610
  %v612 = vpop.f32.mrf.mxu0
  %613 = vdwg.mxu0
  %v614 = vmax.f32 %v596, 0.0
  %v615 = vmax.f32 %v601, 0.0
  %v616 = vmax.f32 %v606, 0.0
  %v617 = vmax.f32 %v611, 0.0
  %v618 = vld [vmem:[%s7] sm:$0xff]
  %v619 = vld [vmem:[%s8] sm:$0xff]
  %621 = vset.pattern.permute.xlu0 0
  %622 = vperm.xlu0 %621, %v619
  %v623 = vpop.permute.xlu0 %622
  %vm625 = vcmask 261120
  %v627 = vsel %vm625, %v618, 0
  %629 = vmatprep.subr.mxu0 0.0
  %630 = vmatpush1.msra.mxu0 0.0
  %631 = vmatprep.subr.mxu0 0.0
  %632 = vmatpush1.msra.mxu0 0.0
  %633 = vmatprep.subr.mxu0 0.0
  %634 = vmatpush1.msra.mxu0 0.0
  %635 = vmatprep.subr.mxu0 0.0
  %636 = vmatpush1.msra.mxu0 0.0
  %637 = vmatprep.subr.mxu0 0.0
  %638 = vmatpush1.msra.mxu0 0.0
  %639 = vmatprep.subr.mxu0 0.0
  %640 = vmatpush1.msra.mxu0 0.0
  %641 = vmatprep.subr.mxu0 0.0
  %642 = vmatpush1.msra.mxu0 0.0
  %643 = vmatprep.subr.mxu0 0.0
  %644 = vmatpush1.msra.mxu0 0.0
  %645 = vmatprep.subr.mxu0 0.0
  %646 = vmatpush1.msra.mxu0 0.0
  %647 = vmatprep.subr.mxu0 0.0
  %648 = vmatpush1.msra.mxu0 0.0
  %649 = vmatprep.subr.mxu0 0.0
  %650 = vmatpush1.msra.mxu0 0.0
  %651 = vmatprep.subr.mxu0 0.0
  %652 = vmatpush1.msra.mxu0 0.0
  %653 = vmatprep.subr.mxu0 0.0
  %654 = vmatpush1.msra.mxu0 %v617
  %655 = vmatprep.subr.mxu0 0.0
  %656 = vmatpush1.msra.mxu0 %v616
  %657 = vmatprep.subr.mxu0 0.0
  %658 = vmatpush1.msra.mxu0 %v615
  %659 = vmatprep.subr.mxu0 0.0
  %660 = vmatpush1.msra.mxu0 %v614
  %661 = vmatprep.subr.mxu0 0.0
  %662 = vmatpush2.msra.mxu0 0.0
  %663 = vmatprep.subr.mxu0 0.0
  %664 = vmatpush2.msra.mxu0 0.0
  %665 = vmatprep.subr.mxu0 0.0
  %666 = vmatpush2.msra.mxu0 0.0
  %667 = vmatprep.subr.mxu0 0.0
  %668 = vmatpush2.msra.mxu0 0.0
  %669 = vmatprep.subr.mxu0 0.0
  %670 = vmatpush2.msra.mxu0 0.0
  %671 = vmatprep.subr.mxu0 0.0
  %672 = vmatpush2.msra.mxu0 0.0
  %673 = vmatprep.subr.mxu0 0.0
  %674 = vmatpush2.msra.mxu0 0.0
  %675 = vmatprep.subr.mxu0 0.0
  %676 = vmatpush2.msra.mxu0 0.0
  %677 = vmatprep.subr.mxu0 0.0
  %678 = vmatpush2.msra.mxu0 0.0
  %679 = vmatprep.subr.mxu0 0.0
  %680 = vmatpush2.msra.mxu0 0.0
  %681 = vmatprep.subr.mxu0 0.0
  %682 = vmatpush2.msra.mxu0 0.0
  %683 = vmatprep.subr.mxu0 0.0
  %684 = vmatpush2.msra.mxu0 0.0
  %685 = vmatprep.subr.mxu0 0.0
  %686 = vmatpush2.msra.mxu0 0.0
  %687 = vmatprep.subr.mxu0 0.0
  %688 = vmatpush2.msra.mxu0 0.0
  %689 = vmatprep.subr.mxu0 0.0
  %690 = vmatpush2.msra.mxu0 0.0
  %691 = vmatprep.subr.mxu0 0.0
  %692 = vmatpush2.msra.mxu0 0.0
  %693 = vmatprep.mubr.f32.mxu0 0.0
  %694 = vmatmul.mubr.f32.gmra.mxu0 %v627
  %v695 = vpop.f32.mrf.mxu0
  %v696 = vadd.f32 %v623, %v695
  %v697 = vpop.f32.mrf.mxu0
  %698 = vdwg.mxu0
  %vm699 = vcmask 64512
  %700 = vst.msk [vmem:[%s9] sm:$0xff] %vm699, %v696
  // Predicated region
  $region38: #{mlp_forward.1} parent=0 // pred_check
    _
  $region39: #{mlp_forward.1} parent=0 // pred_check_branch
    %702 = sbr.rel (0) target = $region41
  $region40: #{mlp_forward.1} parent=0 // pred_region
    _
  $region41: #{mlp_forward.1} parent=0 // pred_fallthru
    _
  // Predicated region
  $region42: #{mlp_forward.1} parent=0 // pred_check
    _
  $region43: #{mlp_forward.1} parent=0 // pred_check_branch
    %704 = sbr.rel (0) target = $region45
  $region44: #{mlp_forward.1} parent=0 // pred_region
    _
  $region45: #{mlp_forward.1} parent=0 // pred_fallthru
    _

</llo_original>
